<compile_context>
chip_gen: v5e
topology: v5e:2x2
jax: 0.10.0
libtpu: 0.0.40
codegen_flags: <defaults>
</compile_context>

<pallas_src>
import jax
import jax.numpy as jnp
import numpy as np
from jax.experimental import pallas as pl
from jax.experimental.pallas import tpu as pltpu

EPS = 0.003
H1 = 256   # fc1 / fa1 width
H2 = 512   # fca1 width (= 2 * H1)


def critic_kernel(s_ref, a_ref, w1p_ref, wap_ref, b_in_ref,
                  wc1_ref, bc1_ref, wc2_ref, bc2_ref, out_ref):
    # Layer 1 (fc1 & fa1 fused): w1p/wap are the row-blocks of the
    # block-diagonal packed weight, so
    #   s @ w1p + a @ wap == [s @ W_fc1 | a @ W_fa1]   -> (TB, 512)
    # bf16 x bf16 MXU dots with f32 accumulation; only the tiny activation
    # tiles are cast, the weights are already bf16.
    x = jnp.dot(s_ref[...].astype(jnp.bfloat16), w1p_ref[...],
                preferred_element_type=jnp.float32)
    x = x + jnp.dot(a_ref[...].astype(jnp.bfloat16), wap_ref[...],
                    preferred_element_type=jnp.float32)
    x = jnp.maximum(x + b_in_ref[...], 0.0).astype(jnp.bfloat16)

    # Layer 2 (fca1): native bf16 MXU matmul, f32 accumulation.
    h = jnp.dot(x, wc1_ref[...], preferred_element_type=jnp.float32)
    h = jnp.maximum(h + bc1_ref[...], 0.0).astype(jnp.bfloat16)

    # Layer 3 (fca2): contract the 512-dim of both operands so the result is
    # (1, TB) -- lane-dense, stored through unmasked full-lane stores instead
    # of a (TB, 1) single-lane column.
    vs = jnp.einsum('od,td->ot', wc2_ref[...], h,
                    preferred_element_type=jnp.float32)
    out_ref[...] = vs + bc2_ref[0, 0]


def _round_up(x, m):
    return ((x + m - 1) // m) * m


def critic_forward(state, action, params, *, tb=512):
    B, S = state.shape
    A = action.shape[1]
    state = state.astype(jnp.float32)
    action = action.astype(jnp.float32)

    if B <= 256:
        TB = B          # single block with the exact batch size
    else:
        # >= 2 grid steps so both v7x TensorCores get a tile; tile rows are a
        # multiple of 256 (matches 2x256 MXU) and capped at tb to bound VMEM.
        TB = min(tb, max(256, _round_up(pl.cdiv(B, 2), 256)))
    n_tiles = pl.cdiv(B, TB)
    padded_b = n_tiles * TB

    row = lambda i: (i, 0)    # batch-tiled inputs
    col = lambda i: (0, i)    # lane-dense (1, TB) output tiles
    rep = lambda i: (0, 0)    # VMEM-resident (reused) weights / biases

    out = pl.pallas_call(
        critic_kernel,
        out_shape=jax.ShapeDtypeStruct((1, padded_b), jnp.float32),
        grid=(n_tiles,),
        in_specs=[
            pl.BlockSpec((TB, S), row),                # state tile        (f32)
            pl.BlockSpec((TB, A), row),                # action tile       (f32)
            pl.BlockSpec((S, H2), rep),                # fc1 rows of W_in  (bf16)
            pl.BlockSpec((A, H2), rep),                # fa1 rows of W_in  (bf16)
            pl.BlockSpec((1, H2), rep),                # [b_fc1 | b_fa1]   (f32)
            pl.BlockSpec((H2, H2), rep),               # fca1 weight       (bf16)
            pl.BlockSpec((1, H2), rep),                # fca1 bias         (f32)
            pl.BlockSpec((1, H2), rep),                # fca2 weight row   (bf16)
            pl.BlockSpec(memory_space=pltpu.MemorySpace.SMEM),  # fca2 bias (f32 scalar)
        ],
        out_specs=pl.BlockSpec((1, TB), col),
        compiler_params=pltpu.CompilerParams(
            dimension_semantics=("parallel",)),
    )(state, action, params["w1p"], params["wap"], params["b_in"],
      params["wc1"], params["bc1"], params["wc2_row"], params["bc2"])

    return out[0, :B].reshape(B, 1)


def init_critic_params(key, state_dim, action_dim):
    """Deterministic re-implementation of the PyTorch init, re-packed for the
    fused kernel.

    nn.Linear weight is (out, in); fanin_init uses v = 1/sqrt(size[0]) = 1/sqrt(out).
    Biases keep PyTorch's default uniform(-1/sqrt(fan_in), 1/sqrt(fan_in)).
    Matmul weights are stored (in, out) in bfloat16; biases stay float32 and the
    kernel accumulates in float32.
    """
    ks = jax.random.split(key, 8)

    def u(k, shape, bound):
        return jax.random.uniform(k, shape, jnp.float32, -bound, bound)

    # fc1: Linear(state_dim, 256), fanin_init -> v = 1/sqrt(256)
    w1 = u(ks[0], (state_dim, H1), 1.0 / np.sqrt(H1))
    b1 = u(ks[1], (1, H1), 1.0 / np.sqrt(state_dim))
    # fa1: Linear(action_dim, 256), fanin_init -> v = 1/sqrt(256)
    wa = u(ks[2], (action_dim, H1), 1.0 / np.sqrt(H1))
    ba = u(ks[3], (1, H1), 1.0 / np.sqrt(action_dim))
    # fca1: Linear(512, 512), fanin_init -> v = 1/sqrt(512)
    wc1 = u(ks[4], (H2, H2), 1.0 / np.sqrt(H2))
    bc1 = u(ks[5], (1, H2), 1.0 / np.sqrt(H2))
    # fca2: Linear(512, 1), weight uniform(-EPS, EPS), bias default
    wc2 = u(ks[6], (H2, 1), EPS)
    bc2 = u(ks[7], (1, 1), 1.0 / np.sqrt(H2))

    # Row-blocks of the block-diagonal packing so
    #   state @ w1p + action @ wap == [state @ w1 | action @ wa]
    w1p = jnp.zeros((state_dim, H2), jnp.float32).at[:, :H1].set(w1)
    wap = jnp.zeros((action_dim, H2), jnp.float32).at[:, H1:].set(wa)
    b_in = jnp.concatenate([b1, ba], axis=1)          # (1, 512)

    return dict(
        w1p=w1p.astype(jnp.bfloat16),
        wap=wap.astype(jnp.bfloat16),
        b_in=b_in,
        wc1=wc1.astype(jnp.bfloat16),
        bc1=bc1,
        wc2_row=wc2.T.astype(jnp.bfloat16),           # (1, 512)
        bc2=bc2,
    )


def critic_ref(state, action, p):
    """Pure-JAX reference of the same forward pass (same bf16-weight /
    bf16-activation math with f32 accumulation)."""
    s = state.astype(jnp.bfloat16)
    a = action.astype(jnp.bfloat16)
    x = (jnp.dot(s, p["w1p"], preferred_element_type=jnp.float32)
         + jnp.dot(a, p["wap"], preferred_element_type=jnp.float32))
    x = jnp.maximum(x + p["b_in"], 0.0).astype(jnp.bfloat16)
    h = jnp.dot(x, p["wc1"], preferred_element_type=jnp.float32)
    h = jnp.maximum(h + p["bc1"], 0.0).astype(jnp.bfloat16)
    vs = jnp.dot(h, p["wc2_row"].T, preferred_element_type=jnp.float32)
    return vs + p["bc2"]


if __name__ == "__main__":
    B, state_dim, action_dim = 2, 16, 4

    key = jax.random.PRNGKey(0)
    k_params, k_state, k_action = jax.random.split(key, 3)

    params = init_critic_params(k_params, state_dim, action_dim)
    state = jax.random.normal(k_state, (B, state_dim), jnp.float32)
    action = jax.random.normal(k_action, (B, action_dim), jnp.float32)

    out = jax.block_until_ready(critic_forward(state, action, params))
    ref = critic_ref(state, action, params)
    np.testing.assert_allclose(np.asarray(out), np.asarray(ref),
                               rtol=2e-3, atol=2e-3)
    assert out.shape == (B, 1)

    # Also exercise the batch-tiled / megacore grid path
    # (two grid steps, partial last tile).
    B2 = 300
    k_s2, k_a2 = jax.random.split(jax.random.PRNGKey(1))
    state2 = jax.random.normal(k_s2, (B2, state_dim), jnp.float32)
    action2 = jax.random.normal(k_a2, (B2, action_dim), jnp.float32)
    out2 = jax.block_until_ready(critic_forward(state2, action2, params))
    ref2 = critic_ref(state2, action2, params)
    np.testing.assert_allclose(np.asarray(out2), np.asarray(ref2),
                               rtol=2e-3, atol=2e-3)
    assert out2.shape == (B2, 1)

    print("KERNEL_OK")
</pallas_src>

<mosaic_0001>
module attributes {stable_mosaic.version = 11 : i64} {
  func.func @critic_kernel(%arg0: i32, %arg1: memref<2x16xf32, #tpu.memory_space<vmem>>, %arg2: memref<2x4xf32, #tpu.memory_space<vmem>>, %arg3: memref<16x512xbf16, #tpu.memory_space<vmem>>, %arg4: memref<4x512xbf16, #tpu.memory_space<vmem>>, %arg5: memref<1x512xf32, #tpu.memory_space<vmem>>, %arg6: memref<512x512xbf16, #tpu.memory_space<vmem>>, %arg7: memref<1x512xf32, #tpu.memory_space<vmem>>, %arg8: memref<1x512xbf16, #tpu.memory_space<vmem>>, %arg9: memref<1x1xf32, #tpu.memory_space<smem>>, %arg10: memref<1x2xf32, #tpu.memory_space<vmem>>) attributes {dimension_semantics = [#tpu.dimension_semantics<parallel>], iteration_bounds = array<i64: 1>, scalar_prefetch = 0 : i64, scratch_operands = 0 : i64, tpu.core_type = #tpu.core_type<tc>, window_params = [{transform_indices = @transform_0, window_bounds = array<i64: 2, 16>}, {transform_indices = @transform_1, window_bounds = array<i64: 2, 4>}, {pipeline_mode = #tpu.pipeline_mode<synchronous>, transform_indices = @transform_2, window_bounds = array<i64: 16, 512>}, {pipeline_mode = #tpu.pipeline_mode<synchronous>, transform_indices = @transform_3, window_bounds = array<i64: 4, 512>}, {pipeline_mode = #tpu.pipeline_mode<synchronous>, transform_indices = @transform_4, window_bounds = array<i64: 1, 512>}, {pipeline_mode = #tpu.pipeline_mode<synchronous>, transform_indices = @transform_5, window_bounds = array<i64: 512, 512>}, {pipeline_mode = #tpu.pipeline_mode<synchronous>, transform_indices = @transform_6, window_bounds = array<i64: 1, 512>}, {pipeline_mode = #tpu.pipeline_mode<synchronous>, transform_indices = @transform_7, window_bounds = array<i64: 1, 512>}, {transform_indices = @transform_8, window_bounds = array<i64: 1, 1>}, {transform_indices = @transform_9, window_bounds = array<i64: 1, 2>}]} {
    %c0 = arith.constant 0 : index
    %c0_0 = arith.constant 0 : index
    %0 = vector.load %arg1[%c0, %c0_0] : memref<2x16xf32, #tpu.memory_space<vmem>>, vector<2x16xf32>
    %1 = arith.truncf %0 : vector<2x16xf32> to vector<2x16xbf16>
    %c0_1 = arith.constant 0 : index
    %c0_2 = arith.constant 0 : index
    %2 = vector.load %arg3[%c0_1, %c0_2] : memref<16x512xbf16, #tpu.memory_space<vmem>>, vector<16x512xbf16>
    %cst = arith.constant dense<0.000000e+00> : vector<2x512xf32>
    %3 = tpu.matmul %1, %2, %cst {dimension_numbers = #tpu.dot_dimension_numbers<[1], [0], [0], [1], [0, 0, 1, 1], [], []>} : vector<2x16xbf16>, vector<16x512xbf16>, vector<2x512xf32> -> vector<2x512xf32>
    %c0_3 = arith.constant 0 : index
    %c0_4 = arith.constant 0 : index
    %4 = vector.load %arg2[%c0_3, %c0_4] : memref<2x4xf32, #tpu.memory_space<vmem>>, vector<2x4xf32>
    %5 = arith.truncf %4 : vector<2x4xf32> to vector<2x4xbf16>
    %c0_5 = arith.constant 0 : index
    %c0_6 = arith.constant 0 : index
    %6 = vector.load %arg4[%c0_5, %c0_6] : memref<4x512xbf16, #tpu.memory_space<vmem>>, vector<4x512xbf16>
    %cst_7 = arith.constant dense<0.000000e+00> : vector<2x512xf32>
    %7 = tpu.matmul %5, %6, %cst_7 {dimension_numbers = #tpu.dot_dimension_numbers<[1], [0], [0], [1], [0, 0, 1, 1], [], []>} : vector<2x4xbf16>, vector<4x512xbf16>, vector<2x512xf32> -> vector<2x512xf32>
    %8 = arith.addf %3, %7 : vector<2x512xf32>
    %c0_8 = arith.constant 0 : index
    %c0_9 = arith.constant 0 : index
    %9 = vector.load %arg5[%c0_8, %c0_9] : memref<1x512xf32, #tpu.memory_space<vmem>>, vector<1x512xf32>
    %10 = vector.broadcast %9 : vector<1x512xf32> to vector<2x512xf32>
    %11 = arith.addf %8, %10 : vector<2x512xf32>
    %cst_10 = arith.constant 0.000000e+00 : f32
    %12 = vector.broadcast %cst_10 : f32 to vector<2x512xf32>
    %13 = arith.maximumf %11, %12 : vector<2x512xf32>
    %14 = arith.truncf %13 : vector<2x512xf32> to vector<2x512xbf16>
    %c0_11 = arith.constant 0 : index
    %c0_12 = arith.constant 0 : index
    %15 = vector.load %arg6[%c0_11, %c0_12] : memref<512x512xbf16, #tpu.memory_space<vmem>>, vector<512x512xbf16>
    %cst_13 = arith.constant dense<0.000000e+00> : vector<2x512xf32>
    %16 = tpu.matmul %14, %15, %cst_13 {dimension_numbers = #tpu.dot_dimension_numbers<[1], [0], [0], [1], [0, 0, 1, 1], [], []>} : vector<2x512xbf16>, vector<512x512xbf16>, vector<2x512xf32> -> vector<2x512xf32>
    %c0_14 = arith.constant 0 : index
    %c0_15 = arith.constant 0 : index
    %17 = vector.load %arg7[%c0_14, %c0_15] : memref<1x512xf32, #tpu.memory_space<vmem>>, vector<1x512xf32>
    %18 = vector.broadcast %17 : vector<1x512xf32> to vector<2x512xf32>
    %19 = arith.addf %16, %18 : vector<2x512xf32>
    %cst_16 = arith.constant 0.000000e+00 : f32
    %20 = vector.broadcast %cst_16 : f32 to vector<2x512xf32>
    %21 = arith.maximumf %19, %20 : vector<2x512xf32>
    %22 = arith.truncf %21 : vector<2x512xf32> to vector<2x512xbf16>
    %c0_17 = arith.constant 0 : index
    %c0_18 = arith.constant 0 : index
    %23 = vector.load %arg8[%c0_17, %c0_18] : memref<1x512xbf16, #tpu.memory_space<vmem>>, vector<1x512xbf16>
    "tpu.trace_start"() <{level = 10 : i32, message = "od,td->ot"}> : () -> ()
    %cst_19 = arith.constant dense<0.000000e+00> : vector<1x2xf32>
    %24 = tpu.matmul %23, %22, %cst_19 {dimension_numbers = #tpu.dot_dimension_numbers<[1], [1], [0], [0], [0, 0, 1, 0], [], []>} : vector<1x512xbf16>, vector<2x512xbf16>, vector<1x2xf32> -> vector<1x2xf32>
    "tpu.trace_stop"() : () -> ()
    %c0_20 = arith.constant 0 : index
    %c0_21 = arith.constant 0 : index
    %25 = memref.load %arg9[%c0_20, %c0_21] : memref<1x1xf32, #tpu.memory_space<smem>>
    %26 = vector.broadcast %25 : f32 to vector<1x2xf32>
    %27 = arith.addf %24, %26 : vector<1x2xf32>
    %c0_22 = arith.constant 0 : index
    %c0_23 = arith.constant 0 : index
    %28 = vector.load %arg10[%c0_22, %c0_23] : memref<1x2xf32, #tpu.memory_space<vmem>>, vector<1x2xf32>
    tpu.vector_store %arg10[%c0_22, %c0_23], %27 {strides = array<i32>} : memref<1x2xf32, #tpu.memory_space<vmem>>, vector<1x2xf32>,
    return
  }
  func.func @transform_0(%arg0: i32) -> (i32, i32) {
    %c0_i32 = arith.constant 0 : i32
    %c0_i32_0 = arith.constant 0 : i32
    return %arg0, %c0_i32 : i32, i32
  }
  func.func @transform_1(%arg0: i32) -> (i32, i32) {
    %c0_i32 = arith.constant 0 : i32
    %c0_i32_0 = arith.constant 0 : i32
    return %arg0, %c0_i32 : i32, i32
  }
  func.func @transform_2(%arg0: i32) -> (i32, i32) {
    %c0_i32 = arith.constant 0 : i32
    %c0_i32_0 = arith.constant 0 : i32
    %c0_i32_1 = arith.constant 0 : i32
    return %c0_i32, %c0_i32_0 : i32, i32
  }
  func.func @transform_3(%arg0: i32) -> (i32, i32) {
    %c0_i32 = arith.constant 0 : i32
    %c0_i32_0 = arith.constant 0 : i32
    %c0_i32_1 = arith.constant 0 : i32
    return %c0_i32, %c0_i32_0 : i32, i32
  }
  func.func @transform_4(%arg0: i32) -> (i32, i32) {
    %c0_i32 = arith.constant 0 : i32
    %c0_i32_0 = arith.constant 0 : i32
    %c0_i32_1 = arith.constant 0 : i32
    return %c0_i32, %c0_i32_0 : i32, i32
  }
  func.func @transform_5(%arg0: i32) -> (i32, i32) {
    %c0_i32 = arith.constant 0 : i32
    %c0_i32_0 = arith.constant 0 : i32
    %c0_i32_1 = arith.constant 0 : i32
    return %c0_i32, %c0_i32_0 : i32, i32
  }
  func.func @transform_6(%arg0: i32) -> (i32, i32) {
    %c0_i32 = arith.constant 0 : i32
    %c0_i32_0 = arith.constant 0 : i32
    %c0_i32_1 = arith.constant 0 : i32
    return %c0_i32, %c0_i32_0 : i32, i32
  }
  func.func @transform_7(%arg0: i32) -> (i32, i32) {
    %c0_i32 = arith.constant 0 : i32
    %c0_i32_0 = arith.constant 0 : i32
    %c0_i32_1 = arith.constant 0 : i32
    return %c0_i32, %c0_i32_0 : i32, i32
  }
  func.func @transform_8(%arg0: i32) -> (i32, i32) {
    %c0_i32 = arith.constant 0 : i32
    %c0_i32_0 = arith.constant 0 : i32
    %c0_i32_1 = arith.constant 0 : i32
    return %c0_i32, %c0_i32_0 : i32, i32
  }
  func.func @transform_9(%arg0: i32) -> (i32, i32) {
    %c0_i32 = arith.constant 0 : i32
    %c0_i32_0 = arith.constant 0 : i32
    return %c0_i32, %arg0 : i32, i32
  }
}

</mosaic_0001>

<llo_original>
// kernel: tpu_custom_call.1
$region0: #{tpu_custom_call.1}
  #allocation0 [shape = 'u32[]', space=smem, size = 0x4, offset = 0x4, fixed_abs, tag = 'smem constant byte address 0x4 - core index']
  #allocation1 [shape = 'u32[72,128]{1,0:T(1,128)}', space=vmem, size = 0x9000, scoped, tag = 'internal scratch']
  #allocation2 [shape = 'f32[1,1]{1,0:T(1,128)S(6)}', space=smem, size = 0x200, scoped, tag = 'scoped memory for tpu_custom_call.1']
  %s0 = inlined_call_operand.hbm [shape: f32[2,16], index: 0, kind: input, shape index: {}]
  %s1 = inlined_call_operand.hbm [shape: f32[2,4], index: 1, kind: input, shape index: {}]
  %s2 = inlined_call_operand.hbm [shape: bf16[16,512], index: 2, kind: input, shape index: {}]
  %s3 = inlined_call_operand.hbm [shape: bf16[4,512], index: 3, kind: input, shape index: {}]
  %s4 = inlined_call_operand.vmem [shape: f32[1,512], index: 4, kind: input, shape index: {}]
  %s5 = inlined_call_operand.hbm [shape: bf16[512,512], index: 5, kind: input, shape index: {}]
  %s6 = inlined_call_operand.hbm [shape: f32[1,512], index: 6, kind: input, shape index: {}]
  %s7 = inlined_call_operand.vmem [shape: bf16[1,512], index: 7, kind: input, shape index: {}]
  %s8 = inlined_call_operand.<no memory space> [shape: f32[1,1], index: 8, kind: input, shape index: {}]
  %s9 = inlined_call_operand.hbm [shape: f32[1,2], index: 9, kind: output, shape index: {}]
  %s10 = sld [smem:[#allocation0]]
  $region70: #{tpu_custom_call.1} parent=0
    _
  %s12 = ssub.s32 1, %s10
  %s13 = scalar_select 0, %s12, %s10
  %14 = sst [smem:[#allocation2]] %s8
  $region1: #{tpu_custom_call.1} parent=0
    #allocation3 [shape = 'u8[1024]{0}', space=vmem, size = 0x400, scoped, tag = 'input window, operand 0, single buffered']
    #allocation4 [shape = 's32[1]{0}', space=sflag, size = 0x4, scoped, tag = 'scoped memory for tpu_custom_call.1']
    #allocation5 [shape = 's32[1]{0}', space=sflag, size = 0x4, scoped, tag = 'scoped memory for tpu_custom_call.1']
    #allocation6 [shape = 'u8[1024]{0}', space=vmem, size = 0x400, scoped, tag = 'input window, operand 1, single buffered']
    #allocation7 [shape = 's32[1]{0}', space=sflag, size = 0x4, scoped, tag = 'scoped memory for tpu_custom_call.1']
    #allocation8 [shape = 'u8[16384]{0}', space=vmem, size = 0x4000, scoped, tag = 'input window, operand 2, single buffered']
    #allocation9 [shape = 'u8[4096]{0}', space=vmem, size = 0x1000, scoped, tag = 'input window, operand 3, single buffered']
    #allocation10 [shape = 's32[1]{0}', space=sflag, size = 0x4, scoped, tag = 'scoped memory for tpu_custom_call.1']
    #allocation11 [shape = 'u8[524288]{0}', space=vmem, size = 0x80000, scoped, tag = 'input window, operand 5, single buffered']
    #allocation12 [shape = 'u8[2048]{0}', space=vmem, size = 0x800, scoped, tag = 'input window, operand 6, single buffered']
    #allocation13 [shape = 's32[1]{0}', space=sflag, size = 0x4, scoped, tag = 'scoped memory for tpu_custom_call.1']
    #allocation14 [shape = 'u8[512]{0}', space=vmem, size = 0x400, scoped, tag = 'output window, operand 0, single buffered']
    %15 = vsyncpa [#allocation4], 0
    %16 = vsyncpa [#allocation7], 0
    %17 = vsyncpa [#allocation10], 0
    %18 = vsyncpa [#allocation13], 0
    %19 = vsyncpa [#allocation5], 0
    // Predicated region
    $region2: #{tpu_custom_call.1} parent=1 // pred_check
      _
    $region3: #{tpu_custom_call.1} parent=1 // pred_check_branch
      %21 = sbr.rel (0) target = $region5
    $region4: #{tpu_custom_call.1} parent=1 // pred_region
      %23 = vsyncadd [#allocation4], 0
      %s25 = sshll.u32 %s0, 4
      %s26 = int_to_ptr.hbm [resolvable:$true] %s25
      %s27 = sshll.u32 [#allocation3], 4
      %s28 = int_to_ptr.vmem [resolvable:$true] %s27
      %30 = dma.hbm_to_vmem [thread:$0]  %s26, 32, %s28, [#allocation4]
    $region5: #{tpu_custom_call.1} parent=1 // pred_fallthru
      _
    // Predicated region
    $region6: #{tpu_custom_call.1} parent=1 // pred_check
      _
    $region7: #{tpu_custom_call.1} parent=1 // pred_check_branch
      %32 = sbr.rel (0) target = $region9
    $region8: #{tpu_custom_call.1} parent=1 // pred_region
      %34 = vsyncadd [#allocation7], 0
      %s36 = sshll.u32 %s1, 4
      %s37 = int_to_ptr.hbm [resolvable:$true] %s36
      %s38 = sshll.u32 [#allocation6], 4
      %s39 = int_to_ptr.vmem [resolvable:$true] %s38
      %41 = dma.hbm_to_vmem [thread:$0]  %s37, 32, %s39, [#allocation7]
    $region9: #{tpu_custom_call.1} parent=1 // pred_fallthru
      _
    // Predicated region
    $region10: #{tpu_custom_call.1} parent=1 // pred_check
      _
    $region11: #{tpu_custom_call.1} parent=1 // pred_check_branch
      %43 = sbr.rel (0) target = $region13
    $region12: #{tpu_custom_call.1} parent=1 // pred_region
      %45 = vsyncadd [#allocation7], 0
      %s46 = sshll.u32 %s2, 4
      %s47 = int_to_ptr.hbm [resolvable:$true] %s46
      %s48 = sshll.u32 [#allocation8], 4
      %s49 = int_to_ptr.vmem [resolvable:$true] %s48
      %54 = dma.hbm_to_vmem [thread:$0]  %s47, 512, %s49, [#allocation7], 256, 256, 16
    $region13: #{tpu_custom_call.1} parent=1 // pred_fallthru
      _
    // Predicated region
    $region14: #{tpu_custom_call.1} parent=1 // pred_check
      _
    $region15: #{tpu_custom_call.1} parent=1 // pred_check_branch
      %56 = sbr.rel (0) target = $region17
    $region16: #{tpu_custom_call.1} parent=1 // pred_region
      %58 = vsyncadd [#allocation10], 0
      %s60 = sshll.u32 %s3, 4
      %s61 = int_to_ptr.hbm [resolvable:$true] %s60
      %s62 = sshll.u32 [#allocation9], 4
      %s63 = int_to_ptr.vmem [resolvable:$true] %s62
      %65 = dma.hbm_to_vmem [thread:$0]  %s61, 128, %s63, [#allocation10]
    $region17: #{tpu_custom_call.1} parent=1 // pred_fallthru
      _
    // Predicated region
    $region18: #{tpu_custom_call.1} parent=1 // pred_check
      _
    $region19: #{tpu_custom_call.1} parent=1 // pred_check_branch
      %67 = sbr.rel (0) target = $region21
    $region20: #{tpu_custom_call.1} parent=1 // pred_region
      _
    $region21: #{tpu_custom_call.1} parent=1 // pred_fallthru
      _
    // Predicated region
    $region22: #{tpu_custom_call.1} parent=1 // pred_check
      _
    $region23: #{tpu_custom_call.1} parent=1 // pred_check_branch
      %69 = sbr.rel (0) target = $region25
    $region24: #{tpu_custom_call.1} parent=1 // pred_region
      %71 = vsyncadd [#allocation10], 0
      %s72 = sshll.u32 %s5, 4
      %s73 = int_to_ptr.hbm [resolvable:$true] %s72
      %s74 = sshll.u32 [#allocation11], 4
      %s75 = int_to_ptr.vmem [resolvable:$true] %s74
      %80 = dma.hbm_to_vmem [thread:$0]  %s73, 16384, %s75, [#allocation10], 256, 256, 16
    $region25: #{tpu_custom_call.1} parent=1 // pred_fallthru
      _
    // Predicated region
    $region26: #{tpu_custom_call.1} parent=1 // pred_check
      _
    $region27: #{tpu_custom_call.1} parent=1 // pred_check_branch
      %82 = sbr.rel (0) target = $region29
    $region28: #{tpu_custom_call.1} parent=1 // pred_region
      %84 = vsyncadd [#allocation13], 0
      %s86 = sshll.u32 %s6, 4
      %s87 = int_to_ptr.hbm [resolvable:$true] %s86
      %s88 = sshll.u32 [#allocation12], 4
      %s89 = int_to_ptr.vmem [resolvable:$true] %s88
      %91 = dma.hbm_to_vmem [thread:$0]  %s87, 64, %s89, [#allocation13]
    $region29: #{tpu_custom_call.1} parent=1 // pred_fallthru
      _
    // Predicated region
    $region30: #{tpu_custom_call.1} parent=1 // pred_check
      _
    $region31: #{tpu_custom_call.1} parent=1 // pred_check_branch
      %93 = sbr.rel (0) target = $region33
    $region32: #{tpu_custom_call.1} parent=1 // pred_region
      _
    $region33: #{tpu_custom_call.1} parent=1 // pred_fallthru
      _
    // Predicated region
    $region34: #{tpu_custom_call.1} parent=1 // pred_check
      _
    $region35: #{tpu_custom_call.1} parent=1 // pred_check_branch
      %95 = sbr.rel (0) target = $region37
    $region36: #{tpu_custom_call.1} parent=1 // pred_region
      _
    $region37: #{tpu_custom_call.1} parent=1 // pred_fallthru
      _
    // Predicated region
    $region38: #{tpu_custom_call.1} parent=1 // pred_check
      _
    $region39: #{tpu_custom_call.1} parent=1 // pred_check_branch
      %97 = sbr.rel (0) target = $region41
    $region40: #{tpu_custom_call.1} parent=1 // pred_region
      %99 = dma.done [#allocation4], 32
    $region41: #{tpu_custom_call.1} parent=1 // pred_fallthru
      _
    // Predicated region
    $region42: #{tpu_custom_call.1} parent=1 // pred_check
      _
    $region43: #{tpu_custom_call.1} parent=1 // pred_check_branch
      %101 = sbr.rel (0) target = $region45
    $region44: #{tpu_custom_call.1} parent=1 // pred_region
      %103 = dma.done [#allocation7], 32
    $region45: #{tpu_custom_call.1} parent=1 // pred_fallthru
      _
    // Predicated region
    $region46: #{tpu_custom_call.1} parent=1 // pred_check
      _
    $region47: #{tpu_custom_call.1} parent=1 // pred_check_branch
      %105 = sbr.rel (0) target = $region49
    $region48: #{tpu_custom_call.1} parent=1 // pred_region
      %107 = dma.done [#allocation7], 512
    $region49: #{tpu_custom_call.1} parent=1 // pred_fallthru
      _
    // Predicated region
    $region50: #{tpu_custom_call.1} parent=1 // pred_check
      _
    $region51: #{tpu_custom_call.1} parent=1 // pred_check_branch
      %109 = sbr.rel (0) target = $region53
    $region52: #{tpu_custom_call.1} parent=1 // pred_region
      %111 = dma.done [#allocation10], 128
    $region53: #{tpu_custom_call.1} parent=1 // pred_fallthru
      _
    // Predicated region
    $region54: #{tpu_custom_call.1} parent=1 // pred_check
      _
    $region55: #{tpu_custom_call.1} parent=1 // pred_check_branch
      %113 = sbr.rel (0) target = $region57
    $region56: #{tpu_custom_call.1} parent=1 // pred_region
      %115 = dma.done [#allocation10], 16384
    $region57: #{tpu_custom_call.1} parent=1 // pred_fallthru
      _
    // Predicated region
    $region58: #{tpu_custom_call.1} parent=1 // pred_check
      _
    $region59: #{tpu_custom_call.1} parent=1 // pred_check_branch
      %117 = sbr.rel (0) target = $region61
    $region60: #{tpu_custom_call.1} parent=1 // pred_region
      %119 = dma.done [#allocation13], 64
    $region61: #{tpu_custom_call.1} parent=1 // pred_fallthru
      _
    %v121 = vld [vmem:[#allocation3] sm:$0x3]
    %v122 = vpack.c.bf16 %v121, %v121
    %v123 = vld [vmem:[#allocation8] sm:$0xff]
    %v124 = vld [vmem:[#allocation8 + $0x8] sm:$0xff]
    %v125 = vld [vmem:[#allocation8 + $0x10] sm:$0xff]
    %v126 = vld [vmem:[#allocation8 + $0x18] sm:$0xff]
    %v127 = vld [vmem:[#allocation6] sm:$0x3]
    %v128 = vpack.c.bf16 %v127, %v127
    %v129 = vld [vmem:[#allocation9] sm:$0xff]
    %131 = vst [vmem:[#allocation1] ss:$4 sm:$0xff] %v129
    %v132 = vld.sshfl [vmem:[#allocation1] sm:$0xff pattern:$0x73625140]
    %v133 = vld.sshfl [vmem:[#allocation1 + $0x8] sm:$0xff pattern:$0x73625140]
    %v134 = vld.sshfl [vmem:[#allocation1 + $0x10] sm:$0xff pattern:$0x73625140]
    %v135 = vld.sshfl [vmem:[#allocation1 + $0x18] sm:$0xff pattern:$0x73625140]
    %vm136 = vcmask 31744
    %v138 = vsel %vm136, %v128, 0
    %vm140 = vcmask 1041408
    %v141 = vsel %vm140, %v132, 0
    %v143 = vsel %vm140, %v133, 0
    %v145 = vsel %vm140, %v134, 0
    %v147 = vsel %vm140, %v135, 0
    %149 = vmatpush.bf16.msra.mxu0 0
    %150 = vmatpush.bf16.msra.mxu0 0
    %151 = vmatpush.bf16.msra.mxu0 0
    %152 = vmatpush.bf16.msra.mxu0 0
    %153 = vmatpush.bf16.msra.mxu0 0
    %154 = vmatpush.bf16.msra.mxu0 0
    %155 = vmatpush.bf16.msra.mxu0 0
    %156 = vmatpush.bf16.msra.mxu0 %v141
    %157 = vmatmul.bf16.gmra.mxu0 %v138
    %v158 = vpop.f32.mrf.mxu0
    %v159 = vadd.f32 0.0, %v158
    %v160 = vpop.f32.mrf.mxu0
    %161 = vdwg.mxu0
    %162 = vmatpush.bf16.msra.mxu0 0
    %163 = vmatpush.bf16.msra.mxu0 0
    %164 = vmatpush.bf16.msra.mxu0 0
    %165 = vmatpush.bf16.msra.mxu0 0
    %166 = vmatpush.bf16.msra.mxu0 0
    %167 = vmatpush.bf16.msra.mxu0 0
    %168 = vmatpush.bf16.msra.mxu0 0
    %169 = vmatpush.bf16.msra.mxu0 %v143
    %170 = vmatmul.bf16.gmra.mxu0 %v138
    %v171 = vpop.f32.mrf.mxu0
    %v172 = vadd.f32 0.0, %v171
    %v173 = vpop.f32.mrf.mxu0
    %174 = vdwg.mxu0
    %175 = vmatpush.bf16.msra.mxu0 0
    %176 = vmatpush.bf16.msra.mxu0 0
    %177 = vmatpush.bf16.msra.mxu0 0
    %178 = vmatpush.bf16.msra.mxu0 0
    %179 = vmatpush.bf16.msra.mxu0 0
    %180 = vmatpush.bf16.msra.mxu0 0
    %181 = vmatpush.bf16.msra.mxu0 0
    %182 = vmatpush.bf16.msra.mxu0 %v145
    %183 = vmatmul.bf16.gmra.mxu0 %v138
    %v184 = vpop.f32.mrf.mxu0
    %v185 = vadd.f32 0.0, %v184
    %v186 = vpop.f32.mrf.mxu0
    %187 = vdwg.mxu0
    %188 = vmatpush.bf16.msra.mxu0 0
    %189 = vmatpush.bf16.msra.mxu0 0
    %190 = vmatpush.bf16.msra.mxu0 0
    %191 = vmatpush.bf16.msra.mxu0 0
    %192 = vmatpush.bf16.msra.mxu0 0
    %193 = vmatpush.bf16.msra.mxu0 0
    %194 = vmatpush.bf16.msra.mxu0 0
    %195 = vmatpush.bf16.msra.mxu0 %v147
    %196 = vmatmul.bf16.gmra.mxu0 %v138
    %v197 = vpop.f32.mrf.mxu0
    %v198 = vadd.f32 0.0, %v197
    %v199 = vpop.f32.mrf.mxu0
    %200 = vdwg.mxu0
    %v205 = vunpack.c.l.b16 %v123
    %v206 = vunpack.c.h.b16 %v123
    %v207 = vunpack.c.l.b16 %v124
    %v208 = vunpack.c.h.b16 %v124
    %v209 = vunpack.c.l.b16 %v125
    %v210 = vunpack.c.h.b16 %v125
    %v211 = vunpack.c.l.b16 %v126
    %v212 = vunpack.c.h.b16 %v126
    %v213 = vpack.c.b16 %v209, %v205
    %v214 = vpack.c.b16 %v210, %v206
    %v215 = vpack.c.b16 %v211, %v207
    %v216 = vpack.c.b16 %v212, %v208
    %vm221 = vcmask 130048
    %v223 = vsel %vm221, %v122, 0
    %225 = vmatpush.bf16.msra.mxu0 0
    %226 = vmatpush.bf16.msra.mxu0 0
    %227 = vmatpush.bf16.msra.mxu0 0
    %228 = vmatpush.bf16.msra.mxu0 0
    %229 = vmatpush.bf16.msra.mxu0 0
    %230 = vmatpush.bf16.msra.mxu0 0
    %231 = vmatpush.bf16.msra.mxu0 0
    %232 = vmatpush.bf16.msra.mxu0 %v213
    %233 = vmatmul.bf16.gmra.mxu0 %v223
    %v234 = vpop.f32.mrf.mxu0
    %v235 = vadd.f32 %v159, %v234
    %v236 = vpop.f32.mrf.mxu0
    %237 = vdwg.mxu0
    %238 = vmatpush.bf16.msra.mxu0 0
    %239 = vmatpush.bf16.msra.mxu0 0
    %240 = vmatpush.bf16.msra.mxu0 0
    %241 = vmatpush.bf16.msra.mxu0 0
    %242 = vmatpush.bf16.msra.mxu0 0
    %243 = vmatpush.bf16.msra.mxu0 0
    %244 = vmatpush.bf16.msra.mxu0 0
    %245 = vmatpush.bf16.msra.mxu0 %v214
    %246 = vmatmul.bf16.gmra.mxu0 %v223
    %v247 = vpop.f32.mrf.mxu0
    %v248 = vadd.f32 %v172, %v247
    %v249 = vpop.f32.mrf.mxu0
    %250 = vdwg.mxu0
    %251 = vmatpush.bf16.msra.mxu0 0
    %252 = vmatpush.bf16.msra.mxu0 0
    %253 = vmatpush.bf16.msra.mxu0 0
    %254 = vmatpush.bf16.msra.mxu0 0
    %255 = vmatpush.bf16.msra.mxu0 0
    %256 = vmatpush.bf16.msra.mxu0 0
    %257 = vmatpush.bf16.msra.mxu0 0
    %258 = vmatpush.bf16.msra.mxu0 %v215
    %259 = vmatmul.bf16.gmra.mxu0 %v223
    %v260 = vpop.f32.mrf.mxu0
    %v261 = vadd.f32 %v185, %v260
    %v262 = vpop.f32.mrf.mxu0
    %263 = vdwg.mxu0
    %264 = vmatpush.bf16.msra.mxu0 0
    %265 = vmatpush.bf16.msra.mxu0 0
    %266 = vmatpush.bf16.msra.mxu0 0
    %267 = vmatpush.bf16.msra.mxu0 0
    %268 = vmatpush.bf16.msra.mxu0 0
    %269 = vmatpush.bf16.msra.mxu0 0
    %270 = vmatpush.bf16.msra.mxu0 0
    %271 = vmatpush.bf16.msra.mxu0 %v216
    %272 = vmatmul.bf16.gmra.mxu0 %v223
    %v273 = vpop.f32.mrf.mxu0
    %v274 = vadd.f32 %v198, %v273
    %v275 = vpop.f32.mrf.mxu0
    %276 = vdwg.mxu0
    %v277 = vld [vmem:[%s4] sm:$0xf]
    %v279 = vperm.slane %v277, 0
    %v280 = vperm.slane %v277, 1
    %v281 = vperm.slane %v277, 2
    %v282 = vperm.slane %v277, 3
    %v287 = vadd.f32 %v235, %v279
    %v288 = vadd.f32 %v248, %v280
    %v289 = vadd.f32 %v261, %v281
    %v290 = vadd.f32 %v274, %v282
    %v291 = vmax.f32 %v287, 0.0
    %v292 = vmax.f32 %v288, 0.0
    %v293 = vmax.f32 %v289, 0.0
    %v294 = vmax.f32 %v290, 0.0
    %v295 = vpack.c.bf16 %v291, %v291
    %v296 = vpack.c.bf16 %v292, %v292
    %v297 = vpack.c.bf16 %v293, %v293
    %v298 = vpack.c.bf16 %v294, %v294
    %v299 = vld [vmem:[#allocation11] sm:$0xff]
    %v300 = vld [vmem:[#allocation11 + $0x8] sm:$0xff]
    %v301 = vld [vmem:[#allocation11 + $0x10] sm:$0xff]
    %v302 = vld [vmem:[#allocation11 + $0x18] sm:$0xff]
    %v303 = vld [vmem:[#allocation11 + $0x20] sm:$0xff]
    %v304 = vld [vmem:[#allocation11 + $0x28] sm:$0xff]
    %v305 = vld [vmem:[#allocation11 + $0x30] sm:$0xff]
    %v306 = vld [vmem:[#allocation11 + $0x38] sm:$0xff]
    %v307 = vld [vmem:[#allocation11 + $0x40] sm:$0xff]
    %v308 = vld [vmem:[#allocation11 + $0x48] sm:$0xff]
    %v309 = vld [vmem:[#allocation11 + $0x50] sm:$0xff]
    %v310 = vld [vmem:[#allocation11 + $0x58] sm:$0xff]
    %v311 = vld [vmem:[#allocation11 + $0x60] sm:$0xff]
    %v312 = vld [vmem:[#allocation11 + $0x68] sm:$0xff]
    %v313 = vld [vmem:[#allocation11 + $0x70] sm:$0xff]
    %v314 = vld [vmem:[#allocation11 + $0x78] sm:$0xff]
    %v315 = vld [vmem:[#allocation11 + $0x80] sm:$0xff]
    %v316 = vld [vmem:[#allocation11 + $0x88] sm:$0xff]
    %v317 = vld [vmem:[#allocation11 + $0x90] sm:$0xff]
    %v318 = vld [vmem:[#allocation11 + $0x98] sm:$0xff]
    %v319 = vld [vmem:[#allocation11 + $0xa0] sm:$0xff]
    %v320 = vld [vmem:[#allocation11 + $0xa8] sm:$0xff]
    %v321 = vld [vmem:[#allocation11 + $0xb0] sm:$0xff]
    %v322 = vld [vmem:[#allocation11 + $0xb8] sm:$0xff]
    %v323 = vld [vmem:[#allocation11 + $0xc0] sm:$0xff]
    %v324 = vld [vmem:[#allocation11 + $0xc8] sm:$0xff]
    %v325 = vld [vmem:[#allocation11 + $0xd0] sm:$0xff]
    %v326 = vld [vmem:[#allocation11 + $0xd8] sm:$0xff]
    %v327 = vld [vmem:[#allocation11 + $0xe0] sm:$0xff]
    %v328 = vld [vmem:[#allocation11 + $0xe8] sm:$0xff]
    %v329 = vld [vmem:[#allocation11 + $0xf0] sm:$0xff]
    %v330 = vld [vmem:[#allocation11 + $0xf8] sm:$0xff]
    %v331 = vld [vmem:[#allocation11 + $0x100] sm:$0xff]
    %v332 = vld [vmem:[#allocation11 + $0x108] sm:$0xff]
    %v333 = vld [vmem:[#allocation11 + $0x110] sm:$0xff]
    %v334 = vld [vmem:[#allocation11 + $0x118] sm:$0xff]
    %v335 = vld [vmem:[#allocation11 + $0x120] sm:$0xff]
    %v336 = vld [vmem:[#allocation11 + $0x128] sm:$0xff]
    %v337 = vld [vmem:[#allocation11 + $0x130] sm:$0xff]
    %v338 = vld [vmem:[#allocation11 + $0x138] sm:$0xff]
    %v339 = vld [vmem:[#allocation11 + $0x140] sm:$0xff]
    %v340 = vld [vmem:[#allocation11 + $0x148] sm:$0xff]
    %v341 = vld [vmem:[#allocation11 + $0x150] sm:$0xff]
    %v342 = vld [vmem:[#allocation11 + $0x158] sm:$0xff]
    %v343 = vld [vmem:[#allocation11 + $0x160] sm:$0xff]
    %v344 = vld [vmem:[#allocation11 + $0x168] sm:$0xff]
    %v345 = vld [vmem:[#allocation11 + $0x170] sm:$0xff]
    %v346 = vld [vmem:[#allocation11 + $0x178] sm:$0xff]
    %v347 = vld [vmem:[#allocation11 + $0x180] sm:$0xff]
    %v348 = vld [vmem:[#allocation11 + $0x188] sm:$0xff]
    %v349 = vld [vmem:[#allocation11 + $0x190] sm:$0xff]
    %v350 = vld [vmem:[#allocation11 + $0x198] sm:$0xff]
    %v351 = vld [vmem:[#allocation11 + $0x1a0] sm:$0xff]
    %v352 = vld [vmem:[#allocation11 + $0x1a8] sm:$0xff]
    %v353 = vld [vmem:[#allocation11 + $0x1b0] sm:$0xff]
    %v354 = vld [vmem:[#allocation11 + $0x1b8] sm:$0xff]
    %v355 = vld [vmem:[#allocation11 + $0x1c0] sm:$0xff]
    %v356 = vld [vmem:[#allocation11 + $0x1c8] sm:$0xff]
    %v357 = vld [vmem:[#allocation11 + $0x1d0] sm:$0xff]
    %v358 = vld [vmem:[#allocation11 + $0x1d8] sm:$0xff]
    %v359 = vld [vmem:[#allocation11 + $0x1e0] sm:$0xff]
    %v360 = vld [vmem:[#allocation11 + $0x1e8] sm:$0xff]
    %v361 = vld [vmem:[#allocation11 + $0x1f0] sm:$0xff]
    %v362 = vld [vmem:[#allocation11 + $0x1f8] sm:$0xff]
    %v363 = vld [vmem:[#allocation11 + $0x200] sm:$0xff]
    %v364 = vld [vmem:[#allocation11 + $0x208] sm:$0xff]
    %v365 = vld [vmem:[#allocation11 + $0x210] sm:$0xff]
    %v366 = vld [vmem:[#allocation11 + $0x218] sm:$0xff]
    %v367 = vld [vmem:[#allocation11 + $0x220] sm:$0xff]
    %v368 = vld [vmem:[#allocation11 + $0x228] sm:$0xff]
    %v369 = vld [vmem:[#allocation11 + $0x230] sm:$0xff]
    %v370 = vld [vmem:[#allocation11 + $0x238] sm:$0xff]
    %v371 = vld [vmem:[#allocation11 + $0x240] sm:$0xff]
    %v372 = vld [vmem:[#allocation11 + $0x248] sm:$0xff]
    %v373 = vld [vmem:[#allocation11 + $0x250] sm:$0xff]
    %v374 = vld [vmem:[#allocation11 + $0x258] sm:$0xff]
    %v375 = vld [vmem:[#allocation11 + $0x260] sm:$0xff]
    %v376 = vld [vmem:[#allocation11 + $0x268] sm:$0xff]
    %v377 = vld [vmem:[#allocation11 + $0x270] sm:$0xff]
    %v378 = vld [vmem:[#allocation11 + $0x278] sm:$0xff]
    %v379 = vld [vmem:[#allocation11 + $0x280] sm:$0xff]
    %v380 = vld [vmem:[#allocation11 + $0x288] sm:$0xff]
    %v381 = vld [vmem:[#allocation11 + $0x290] sm:$0xff]
    %v382 = vld [vmem:[#allocation11 + $0x298] sm:$0xff]
    %v383 = vld [vmem:[#allocation11 + $0x2a0] sm:$0xff]
    %v384 = vld [vmem:[#allocation11 + $0x2a8] sm:$0xff]
    %v385 = vld [vmem:[#allocation11 + $0x2b0] sm:$0xff]
    %v386 = vld [vmem:[#allocation11 + $0x2b8] sm:$0xff]
    %v387 = vld [vmem:[#allocation11 + $0x2c0] sm:$0xff]
    %v388 = vld [vmem:[#allocation11 + $0x2c8] sm:$0xff]
    %v389 = vld [vmem:[#allocation11 + $0x2d0] sm:$0xff]
    %v390 = vld [vmem:[#allocation11 + $0x2d8] sm:$0xff]
    %v391 = vld [vmem:[#allocation11 + $0x2e0] sm:$0xff]
    %v392 = vld [vmem:[#allocation11 + $0x2e8] sm:$0xff]
    %v393 = vld [vmem:[#allocation11 + $0x2f0] sm:$0xff]
    %v394 = vld [vmem:[#allocation11 + $0x2f8] sm:$0xff]
    %v395 = vld [vmem:[#allocation11 + $0x300] sm:$0xff]
    %v396 = vld [vmem:[#allocation11 + $0x308] sm:$0xff]
    %v397 = vld [vmem:[#allocation11 + $0x310] sm:$0xff]
    %v398 = vld [vmem:[#allocation11 + $0x318] sm:$0xff]
    %v399 = vld [vmem:[#allocation11 + $0x320] sm:$0xff]
    %v400 = vld [vmem:[#allocation11 + $0x328] sm:$0xff]
    %v401 = vld [vmem:[#allocation11 + $0x330] sm:$0xff]
    %v402 = vld [vmem:[#allocation11 + $0x338] sm:$0xff]
    %v403 = vld [vmem:[#allocation11 + $0x340] sm:$0xff]
    %v404 = vld [vmem:[#allocation11 + $0x348] sm:$0xff]
    %v405 = vld [vmem:[#allocation11 + $0x350] sm:$0xff]
    %v406 = vld [vmem:[#allocation11 + $0x358] sm:$0xff]
    %v407 = vld [vmem:[#allocation11 + $0x360] sm:$0xff]
    %v408 = vld [vmem:[#allocation11 + $0x368] sm:$0xff]
    %v409 = vld [vmem:[#allocation11 + $0x370] sm:$0xff]
    %v410 = vld [vmem:[#allocation11 + $0x378] sm:$0xff]
    %v411 = vld [vmem:[#allocation11 + $0x380] sm:$0xff]
    %v412 = vld [vmem:[#allocation11 + $0x388] sm:$0xff]
    %v413 = vld [vmem:[#allocation11 + $0x390] sm:$0xff]
    %v414 = vld [vmem:[#allocation11 + $0x398] sm:$0xff]
    %v415 = vld [vmem:[#allocation11 + $0x3a0] sm:$0xff]
    %v416 = vld [vmem:[#allocation11 + $0x3a8] sm:$0xff]
    %v417 = vld [vmem:[#allocation11 + $0x3b0] sm:$0xff]
    %v418 = vld [vmem:[#allocation11 + $0x3b8] sm:$0xff]
    %v419 = vld [vmem:[#allocation11 + $0x3c0] sm:$0xff]
    %v420 = vld [vmem:[#allocation11 + $0x3c8] sm:$0xff]
    %v421 = vld [vmem:[#allocation11 + $0x3d0] sm:$0xff]
    %v422 = vld [vmem:[#allocation11 + $0x3d8] sm:$0xff]
    %v423 = vld [vmem:[#allocation11 + $0x3e0] sm:$0xff]
    %v424 = vld [vmem:[#allocation11 + $0x3e8] sm:$0xff]
    %v425 = vld [vmem:[#allocation11 + $0x3f0] sm:$0xff]
    %v426 = vld [vmem:[#allocation11 + $0x3f8] sm:$0xff]
    %v427 = vld [vmem:[#allocation12] sm:$0xf]
    %v429 = vperm.slane %v427, 0
    %v430 = vperm.slane %v427, 1
    %v431 = vperm.slane %v427, 2
    %v432 = vperm.slane %v427, 3
    %v565 = vunpack.c.l.b16 %v299
    %v566 = vunpack.c.h.b16 %v299
    %v567 = vunpack.c.l.b16 %v300
    %v568 = vunpack.c.h.b16 %v300
    %v569 = vunpack.c.l.b16 %v301
    %v570 = vunpack.c.h.b16 %v301
    %v571 = vunpack.c.l.b16 %v302
    %v572 = vunpack.c.h.b16 %v302
    %v573 = vunpack.c.l.b16 %v303
    %v574 = vunpack.c.h.b16 %v303
    %v575 = vunpack.c.l.b16 %v304
    %v576 = vunpack.c.h.b16 %v304
    %v577 = vunpack.c.l.b16 %v305
    %v578 = vunpack.c.h.b16 %v305
    %v579 = vunpack.c.l.b16 %v306
    %v580 = vunpack.c.h.b16 %v306
    %v581 = vunpack.c.l.b16 %v307
    %v582 = vunpack.c.h.b16 %v307
    %v583 = vunpack.c.l.b16 %v308
    %v584 = vunpack.c.h.b16 %v308
    %v585 = vunpack.c.l.b16 %v309
    %v586 = vunpack.c.h.b16 %v309
    %v587 = vunpack.c.l.b16 %v310
    %v588 = vunpack.c.h.b16 %v310
    %v589 = vunpack.c.l.b16 %v311
    %v590 = vunpack.c.h.b16 %v311
    %v591 = vunpack.c.l.b16 %v312
    %v592 = vunpack.c.h.b16 %v312
    %v593 = vunpack.c.l.b16 %v313
    %v594 = vunpack.c.h.b16 %v313
    %v595 = vunpack.c.l.b16 %v314
    %v596 = vunpack.c.h.b16 %v314
    %v597 = vunpack.c.l.b16 %v315
    %v598 = vunpack.c.h.b16 %v315
    %v599 = vunpack.c.l.b16 %v316
    %v600 = vunpack.c.h.b16 %v316
    %v601 = vunpack.c.l.b16 %v317
    %v602 = vunpack.c.h.b16 %v317
    %v603 = vunpack.c.l.b16 %v318
    %v604 = vunpack.c.h.b16 %v318
    %v605 = vunpack.c.l.b16 %v319
    %v606 = vunpack.c.h.b16 %v319
    %v607 = vunpack.c.l.b16 %v320
    %v608 = vunpack.c.h.b16 %v320
    %v609 = vunpack.c.l.b16 %v321
    %v610 = vunpack.c.h.b16 %v321
    %v611 = vunpack.c.l.b16 %v322
    %v612 = vunpack.c.h.b16 %v322
    %v613 = vunpack.c.l.b16 %v323
    %v614 = vunpack.c.h.b16 %v323
    %v615 = vunpack.c.l.b16 %v324
    %v616 = vunpack.c.h.b16 %v324
    %v617 = vunpack.c.l.b16 %v325
    %v618 = vunpack.c.h.b16 %v325
    %v619 = vunpack.c.l.b16 %v326
    %v620 = vunpack.c.h.b16 %v326
    %v621 = vunpack.c.l.b16 %v327
    %v622 = vunpack.c.h.b16 %v327
    %v623 = vunpack.c.l.b16 %v328
    %v624 = vunpack.c.h.b16 %v328
    %v625 = vunpack.c.l.b16 %v329
    %v626 = vunpack.c.h.b16 %v329
    %v627 = vunpack.c.l.b16 %v330
    %v628 = vunpack.c.h.b16 %v330
    %v629 = vunpack.c.l.b16 %v331
    %v630 = vunpack.c.h.b16 %v331
    %v631 = vunpack.c.l.b16 %v332
    %v632 = vunpack.c.h.b16 %v332
    %v633 = vunpack.c.l.b16 %v333
    %v634 = vunpack.c.h.b16 %v333
    %v635 = vunpack.c.l.b16 %v334
    %v636 = vunpack.c.h.b16 %v334
    %v637 = vunpack.c.l.b16 %v335
    %v638 = vunpack.c.h.b16 %v335
    %v639 = vunpack.c.l.b16 %v336
    %v640 = vunpack.c.h.b16 %v336
    %v641 = vunpack.c.l.b16 %v337
    %v642 = vunpack.c.h.b16 %v337
    %v643 = vunpack.c.l.b16 %v338
    %v644 = vunpack.c.h.b16 %v338
    %v645 = vunpack.c.l.b16 %v339
    %v646 = vunpack.c.h.b16 %v339
    %v647 = vunpack.c.l.b16 %v340
    %v648 = vunpack.c.h.b16 %v340
    %v649 = vunpack.c.l.b16 %v341
    %v650 = vunpack.c.h.b16 %v341
    %v651 = vunpack.c.l.b16 %v342
    %v652 = vunpack.c.h.b16 %v342
    %v653 = vunpack.c.l.b16 %v343
    %v654 = vunpack.c.h.b16 %v343
    %v655 = vunpack.c.l.b16 %v344
    %v656 = vunpack.c.h.b16 %v344
    %v657 = vunpack.c.l.b16 %v345
    %v658 = vunpack.c.h.b16 %v345
    %v659 = vunpack.c.l.b16 %v346
    %v660 = vunpack.c.h.b16 %v346
    %v661 = vunpack.c.l.b16 %v347
    %v662 = vunpack.c.h.b16 %v347
    %v663 = vunpack.c.l.b16 %v348
    %v664 = vunpack.c.h.b16 %v348
    %v665 = vunpack.c.l.b16 %v349
    %v666 = vunpack.c.h.b16 %v349
    %v667 = vunpack.c.l.b16 %v350
    %v668 = vunpack.c.h.b16 %v350
    %v669 = vunpack.c.l.b16 %v351
    %v670 = vunpack.c.h.b16 %v351
    %v671 = vunpack.c.l.b16 %v352
    %v672 = vunpack.c.h.b16 %v352
    %v673 = vunpack.c.l.b16 %v353
    %v674 = vunpack.c.h.b16 %v353
    %v675 = vunpack.c.l.b16 %v354
    %v676 = vunpack.c.h.b16 %v354
    %v677 = vunpack.c.l.b16 %v355
    %v678 = vunpack.c.h.b16 %v355
    %v679 = vunpack.c.l.b16 %v356
    %v680 = vunpack.c.h.b16 %v356
    %v681 = vunpack.c.l.b16 %v357
    %v682 = vunpack.c.h.b16 %v357
    %v683 = vunpack.c.l.b16 %v358
    %v684 = vunpack.c.h.b16 %v358
    %v685 = vunpack.c.l.b16 %v359
    %v686 = vunpack.c.h.b16 %v359
    %v687 = vunpack.c.l.b16 %v360
    %v688 = vunpack.c.h.b16 %v360
    %v689 = vunpack.c.l.b16 %v361
    %v690 = vunpack.c.h.b16 %v361
    %v691 = vunpack.c.l.b16 %v362
    %v692 = vunpack.c.h.b16 %v362
    %v693 = vunpack.c.l.b16 %v363
    %v694 = vunpack.c.h.b16 %v363
    %v695 = vunpack.c.l.b16 %v364
    %v696 = vunpack.c.h.b16 %v364
    %v697 = vunpack.c.l.b16 %v365
    %v698 = vunpack.c.h.b16 %v365
    %v699 = vunpack.c.l.b16 %v366
    %v700 = vunpack.c.h.b16 %v366
    %v701 = vunpack.c.l.b16 %v367
    %v702 = vunpack.c.h.b16 %v367
    %v703 = vunpack.c.l.b16 %v368
    %v704 = vunpack.c.h.b16 %v368
    %v705 = vunpack.c.l.b16 %v369
    %v706 = vunpack.c.h.b16 %v369
    %v707 = vunpack.c.l.b16 %v370
    %v708 = vunpack.c.h.b16 %v370
    %v709 = vunpack.c.l.b16 %v371
    %v710 = vunpack.c.h.b16 %v371
    %v711 = vunpack.c.l.b16 %v372
    %v712 = vunpack.c.h.b16 %v372
    %v713 = vunpack.c.l.b16 %v373
    %v714 = vunpack.c.h.b16 %v373
    %v715 = vunpack.c.l.b16 %v374
    %v716 = vunpack.c.h.b16 %v374
    %v717 = vunpack.c.l.b16 %v375
    %v718 = vunpack.c.h.b16 %v375
    %v719 = vunpack.c.l.b16 %v376
    %v720 = vunpack.c.h.b16 %v376
    %v721 = vunpack.c.l.b16 %v377
    %v722 = vunpack.c.h.b16 %v377
    %v723 = vunpack.c.l.b16 %v378
    %v724 = vunpack.c.h.b16 %v378
    %v725 = vunpack.c.l.b16 %v379
    %v726 = vunpack.c.h.b16 %v379
    %v727 = vunpack.c.l.b16 %v380
    %v728 = vunpack.c.h.b16 %v380
    %v729 = vunpack.c.l.b16 %v381
    %v730 = vunpack.c.h.b16 %v381
    %v731 = vunpack.c.l.b16 %v382
    %v732 = vunpack.c.h.b16 %v382
    %v733 = vunpack.c.l.b16 %v383
    %v734 = vunpack.c.h.b16 %v383
    %v735 = vunpack.c.l.b16 %v384
    %v736 = vunpack.c.h.b16 %v384
    %v737 = vunpack.c.l.b16 %v385
    %v738 = vunpack.c.h.b16 %v385
    %v739 = vunpack.c.l.b16 %v386
    %v740 = vunpack.c.h.b16 %v386
    %v741 = vunpack.c.l.b16 %v387
    %v742 = vunpack.c.h.b16 %v387
    %v743 = vunpack.c.l.b16 %v388
    %v744 = vunpack.c.h.b16 %v388
    %v745 = vunpack.c.l.b16 %v389
    %v746 = vunpack.c.h.b16 %v389
    %v747 = vunpack.c.l.b16 %v390
    %v748 = vunpack.c.h.b16 %v390
    %v749 = vunpack.c.l.b16 %v391
    %v750 = vunpack.c.h.b16 %v391
    %v751 = vunpack.c.l.b16 %v392
    %v752 = vunpack.c.h.b16 %v392
    %v753 = vunpack.c.l.b16 %v393
    %v754 = vunpack.c.h.b16 %v393
    %v755 = vunpack.c.l.b16 %v394
    %v756 = vunpack.c.h.b16 %v394
    %v757 = vunpack.c.l.b16 %v395
    %v758 = vunpack.c.h.b16 %v395
    %v759 = vunpack.c.l.b16 %v396
    %v760 = vunpack.c.h.b16 %v396
    %v761 = vunpack.c.l.b16 %v397
    %v762 = vunpack.c.h.b16 %v397
    %v763 = vunpack.c.l.b16 %v398
    %v764 = vunpack.c.h.b16 %v398
    %v765 = vunpack.c.l.b16 %v399
    %v766 = vunpack.c.h.b16 %v399
    %v767 = vunpack.c.l.b16 %v400
    %v768 = vunpack.c.h.b16 %v400
    %v769 = vunpack.c.l.b16 %v401
    %v770 = vunpack.c.h.b16 %v401
    %v771 = vunpack.c.l.b16 %v402
    %v772 = vunpack.c.h.b16 %v402
    %v773 = vunpack.c.l.b16 %v403
    %v774 = vunpack.c.h.b16 %v403
    %v775 = vunpack.c.l.b16 %v404
    %v776 = vunpack.c.h.b16 %v404
    %v777 = vunpack.c.l.b16 %v405
    %v778 = vunpack.c.h.b16 %v405
    %v779 = vunpack.c.l.b16 %v406
    %v780 = vunpack.c.h.b16 %v406
    %v781 = vunpack.c.l.b16 %v407
    %v782 = vunpack.c.h.b16 %v407
    %v783 = vunpack.c.l.b16 %v408
    %v784 = vunpack.c.h.b16 %v408
    %v785 = vunpack.c.l.b16 %v409
    %v786 = vunpack.c.h.b16 %v409
    %v787 = vunpack.c.l.b16 %v410
    %v788 = vunpack.c.h.b16 %v410
    %v789 = vunpack.c.l.b16 %v411
    %v790 = vunpack.c.h.b16 %v411
    %v791 = vunpack.c.l.b16 %v412
    %v792 = vunpack.c.h.b16 %v412
    %v793 = vunpack.c.l.b16 %v413
    %v794 = vunpack.c.h.b16 %v413
    %v795 = vunpack.c.l.b16 %v414
    %v796 = vunpack.c.h.b16 %v414
    %v797 = vunpack.c.l.b16 %v415
    %v798 = vunpack.c.h.b16 %v415
    %v799 = vunpack.c.l.b16 %v416
    %v800 = vunpack.c.h.b16 %v416
    %v801 = vunpack.c.l.b16 %v417
    %v802 = vunpack.c.h.b16 %v417
    %v803 = vunpack.c.l.b16 %v418
    %v804 = vunpack.c.h.b16 %v418
    %v805 = vunpack.c.l.b16 %v419
    %v806 = vunpack.c.h.b16 %v419
    %v807 = vunpack.c.l.b16 %v420
    %v808 = vunpack.c.h.b16 %v420
    %v809 = vunpack.c.l.b16 %v421
    %v810 = vunpack.c.h.b16 %v421
    %v811 = vunpack.c.l.b16 %v422
    %v812 = vunpack.c.h.b16 %v422
    %v813 = vunpack.c.l.b16 %v423
    %v814 = vunpack.c.h.b16 %v423
    %v815 = vunpack.c.l.b16 %v424
    %v816 = vunpack.c.h.b16 %v424
    %v817 = vunpack.c.l.b16 %v425
    %v818 = vunpack.c.h.b16 %v425
    %v819 = vunpack.c.l.b16 %v426
    %v820 = vunpack.c.h.b16 %v426
    %v821 = vpack.c.b16 %v569, %v565
    %v822 = vpack.c.b16 %v570, %v566
    %v823 = vpack.c.b16 %v571, %v567
    %v824 = vpack.c.b16 %v572, %v568
    %v825 = vpack.c.b16 %v577, %v573
    %v826 = vpack.c.b16 %v578, %v574
    %v827 = vpack.c.b16 %v579, %v575
    %v828 = vpack.c.b16 %v580, %v576
    %v829 = vpack.c.b16 %v585, %v581
    %v830 = vpack.c.b16 %v586, %v582
    %v831 = vpack.c.b16 %v587, %v583
    %v832 = vpack.c.b16 %v588, %v584
    %v833 = vpack.c.b16 %v593, %v589
    %v834 = vpack.c.b16 %v594, %v590
    %v835 = vpack.c.b16 %v595, %v591
    %v836 = vpack.c.b16 %v596, %v592
    %v837 = vpack.c.b16 %v601, %v597
    %v838 = vpack.c.b16 %v602, %v598
    %v839 = vpack.c.b16 %v603, %v599
    %v840 = vpack.c.b16 %v604, %v600
    %v841 = vpack.c.b16 %v609, %v605
    %v842 = vpack.c.b16 %v610, %v606
    %v843 = vpack.c.b16 %v611, %v607
    %v844 = vpack.c.b16 %v612, %v608
    %v845 = vpack.c.b16 %v617, %v613
    %v846 = vpack.c.b16 %v618, %v614
    %v847 = vpack.c.b16 %v619, %v615
    %v848 = vpack.c.b16 %v620, %v616
    %v849 = vpack.c.b16 %v625, %v621
    %v850 = vpack.c.b16 %v626, %v622
    %v851 = vpack.c.b16 %v627, %v623
    %v852 = vpack.c.b16 %v628, %v624
    %v853 = vpack.c.b16 %v633, %v629
    %v854 = vpack.c.b16 %v634, %v630
    %v855 = vpack.c.b16 %v635, %v631
    %v856 = vpack.c.b16 %v636, %v632
    %v857 = vpack.c.b16 %v641, %v637
    %v858 = vpack.c.b16 %v642, %v638
    %v859 = vpack.c.b16 %v643, %v639
    %v860 = vpack.c.b16 %v644, %v640
    %v861 = vpack.c.b16 %v649, %v645
    %v862 = vpack.c.b16 %v650, %v646
    %v863 = vpack.c.b16 %v651, %v647
    %v864 = vpack.c.b16 %v652, %v648
    %v865 = vpack.c.b16 %v657, %v653
    %v866 = vpack.c.b16 %v658, %v654
    %v867 = vpack.c.b16 %v659, %v655
    %v868 = vpack.c.b16 %v660, %v656
    %v869 = vpack.c.b16 %v665, %v661
    %v870 = vpack.c.b16 %v666, %v662
    %v871 = vpack.c.b16 %v667, %v663
    %v872 = vpack.c.b16 %v668, %v664
    %v873 = vpack.c.b16 %v673, %v669
    %v874 = vpack.c.b16 %v674, %v670
    %v875 = vpack.c.b16 %v675, %v671
    %v876 = vpack.c.b16 %v676, %v672
    %v877 = vpack.c.b16 %v681, %v677
    %v878 = vpack.c.b16 %v682, %v678
    %v879 = vpack.c.b16 %v683, %v679
    %v880 = vpack.c.b16 %v684, %v680
    %v881 = vpack.c.b16 %v689, %v685
    %v882 = vpack.c.b16 %v690, %v686
    %v883 = vpack.c.b16 %v691, %v687
    %v884 = vpack.c.b16 %v692, %v688
    %v885 = vpack.c.b16 %v697, %v693
    %v886 = vpack.c.b16 %v698, %v694
    %v887 = vpack.c.b16 %v699, %v695
    %v888 = vpack.c.b16 %v700, %v696
    %v889 = vpack.c.b16 %v705, %v701
    %v890 = vpack.c.b16 %v706, %v702
    %v891 = vpack.c.b16 %v707, %v703
    %v892 = vpack.c.b16 %v708, %v704
    %v893 = vpack.c.b16 %v713, %v709
    %v894 = vpack.c.b16 %v714, %v710
    %v895 = vpack.c.b16 %v715, %v711
    %v896 = vpack.c.b16 %v716, %v712
    %v897 = vpack.c.b16 %v721, %v717
    %v898 = vpack.c.b16 %v722, %v718
    %v899 = vpack.c.b16 %v723, %v719
    %v900 = vpack.c.b16 %v724, %v720
    %v901 = vpack.c.b16 %v729, %v725
    %v902 = vpack.c.b16 %v730, %v726
    %v903 = vpack.c.b16 %v731, %v727
    %v904 = vpack.c.b16 %v732, %v728
    %v905 = vpack.c.b16 %v737, %v733
    %v906 = vpack.c.b16 %v738, %v734
    %v907 = vpack.c.b16 %v739, %v735
    %v908 = vpack.c.b16 %v740, %v736
    %v909 = vpack.c.b16 %v745, %v741
    %v910 = vpack.c.b16 %v746, %v742
    %v911 = vpack.c.b16 %v747, %v743
    %v912 = vpack.c.b16 %v748, %v744
    %v913 = vpack.c.b16 %v753, %v749
    %v914 = vpack.c.b16 %v754, %v750
    %v915 = vpack.c.b16 %v755, %v751
    %v916 = vpack.c.b16 %v756, %v752
    %v917 = vpack.c.b16 %v761, %v757
    %v918 = vpack.c.b16 %v762, %v758
    %v919 = vpack.c.b16 %v763, %v759
    %v920 = vpack.c.b16 %v764, %v760
    %v921 = vpack.c.b16 %v769, %v765
    %v922 = vpack.c.b16 %v770, %v766
    %v923 = vpack.c.b16 %v771, %v767
    %v924 = vpack.c.b16 %v772, %v768
    %v925 = vpack.c.b16 %v777, %v773
    %v926 = vpack.c.b16 %v778, %v774
    %v927 = vpack.c.b16 %v779, %v775
    %v928 = vpack.c.b16 %v780, %v776
    %v929 = vpack.c.b16 %v785, %v781
    %v930 = vpack.c.b16 %v786, %v782
    %v931 = vpack.c.b16 %v787, %v783
    %v932 = vpack.c.b16 %v788, %v784
    %v933 = vpack.c.b16 %v793, %v789
    %v934 = vpack.c.b16 %v794, %v790
    %v935 = vpack.c.b16 %v795, %v791
    %v936 = vpack.c.b16 %v796, %v792
    %v937 = vpack.c.b16 %v801, %v797
    %v938 = vpack.c.b16 %v802, %v798
    %v939 = vpack.c.b16 %v803, %v799
    %v940 = vpack.c.b16 %v804, %v800
    %v941 = vpack.c.b16 %v809, %v805
    %v942 = vpack.c.b16 %v810, %v806
    %v943 = vpack.c.b16 %v811, %v807
    %v944 = vpack.c.b16 %v812, %v808
    %v945 = vpack.c.b16 %v817, %v813
    %v946 = vpack.c.b16 %v818, %v814
    %v947 = vpack.c.b16 %v819, %v815
    %v948 = vpack.c.b16 %v820, %v816
    %1077 = vmatpush.bf16.msra.mxu0 %v849
    %1078 = vmatpush.bf16.msra.mxu0 %v845
    %1079 = vmatpush.bf16.msra.mxu0 %v841
    %1080 = vmatpush.bf16.msra.mxu0 %v837
    %1081 = vmatpush.bf16.msra.mxu0 %v833
    %1082 = vmatpush.bf16.msra.mxu0 %v829
    %1083 = vmatpush.bf16.msra.mxu0 %v825
    %1084 = vmatpush.bf16.msra.mxu0 %v821
    %1085 = vmatmul.bf16.gmra.mxu0 %v295
    %v1086 = vpop.f32.mrf.mxu0
    %v1087 = vadd.f32 %v429, %v1086
    %v1088 = vpop.f32.mrf.mxu0
    %1089 = vdwg.mxu0
    %1090 = vmatpush.bf16.msra.mxu0 %v881
    %1091 = vmatpush.bf16.msra.mxu0 %v877
    %1092 = vmatpush.bf16.msra.mxu0 %v873
    %1093 = vmatpush.bf16.msra.mxu0 %v869
    %1094 = vmatpush.bf16.msra.mxu0 %v865
    %1095 = vmatpush.bf16.msra.mxu0 %v861
    %1096 = vmatpush.bf16.msra.mxu0 %v857
    %1097 = vmatpush.bf16.msra.mxu0 %v853
    %1098 = vmatmul.bf16.gmra.mxu0 %v296
    %v1099 = vpop.f32.mrf.mxu0
    %v1100 = vadd.f32 %v1087, %v1099
    %v1101 = vpop.f32.mrf.mxu0
    %1102 = vdwg.mxu0
    %1103 = vmatpush.bf16.msra.mxu0 %v913
    %1104 = vmatpush.bf16.msra.mxu0 %v909
    %1105 = vmatpush.bf16.msra.mxu0 %v905
    %1106 = vmatpush.bf16.msra.mxu0 %v901
    %1107 = vmatpush.bf16.msra.mxu0 %v897
    %1108 = vmatpush.bf16.msra.mxu0 %v893
    %1109 = vmatpush.bf16.msra.mxu0 %v889
    %1110 = vmatpush.bf16.msra.mxu0 %v885
    %1111 = vmatmul.bf16.gmra.mxu0 %v297
    %v1112 = vpop.f32.mrf.mxu0
    %v1113 = vadd.f32 %v1100, %v1112
    %v1114 = vpop.f32.mrf.mxu0
    %1115 = vdwg.mxu0
    %1116 = vmatpush.bf16.msra.mxu0 %v945
    %1117 = vmatpush.bf16.msra.mxu0 %v941
    %1118 = vmatpush.bf16.msra.mxu0 %v937
    %1119 = vmatpush.bf16.msra.mxu0 %v933
    %1120 = vmatpush.bf16.msra.mxu0 %v929
    %1121 = vmatpush.bf16.msra.mxu0 %v925
    %1122 = vmatpush.bf16.msra.mxu0 %v921
    %1123 = vmatpush.bf16.msra.mxu0 %v917
    %1124 = vmatmul.bf16.gmra.mxu0 %v298
    %v1125 = vpop.f32.mrf.mxu0
    %v1126 = vadd.f32 %v1113, %v1125
    %v1127 = vpop.f32.mrf.mxu0
    %1128 = vdwg.mxu0
    %1129 = vmatpush.bf16.msra.mxu0 %v850
    %1130 = vmatpush.bf16.msra.mxu0 %v846
    %1131 = vmatpush.bf16.msra.mxu0 %v842
    %1132 = vmatpush.bf16.msra.mxu0 %v838
    %1133 = vmatpush.bf16.msra.mxu0 %v834
    %1134 = vmatpush.bf16.msra.mxu0 %v830
    %1135 = vmatpush.bf16.msra.mxu0 %v826
    %1136 = vmatpush.bf16.msra.mxu0 %v822
    %1137 = vmatmul.bf16.gmra.mxu0 %v295
    %v1138 = vpop.f32.mrf.mxu0
    %v1139 = vadd.f32 %v430, %v1138
    %v1140 = vpop.f32.mrf.mxu0
    %1141 = vdwg.mxu0
    %1142 = vmatpush.bf16.msra.mxu0 %v882
    %1143 = vmatpush.bf16.msra.mxu0 %v878
    %1144 = vmatpush.bf16.msra.mxu0 %v874
    %1145 = vmatpush.bf16.msra.mxu0 %v870
    %1146 = vmatpush.bf16.msra.mxu0 %v866
    %1147 = vmatpush.bf16.msra.mxu0 %v862
    %1148 = vmatpush.bf16.msra.mxu0 %v858
    %1149 = vmatpush.bf16.msra.mxu0 %v854
    %1150 = vmatmul.bf16.gmra.mxu0 %v296
    %v1151 = vpop.f32.mrf.mxu0
    %v1152 = vadd.f32 %v1139, %v1151
    %v1153 = vpop.f32.mrf.mxu0
    %1154 = vdwg.mxu0
    %1155 = vmatpush.bf16.msra.mxu0 %v914
    %1156 = vmatpush.bf16.msra.mxu0 %v910
    %1157 = vmatpush.bf16.msra.mxu0 %v906
    %1158 = vmatpush.bf16.msra.mxu0 %v902
    %1159 = vmatpush.bf16.msra.mxu0 %v898
    %1160 = vmatpush.bf16.msra.mxu0 %v894
    %1161 = vmatpush.bf16.msra.mxu0 %v890
    %1162 = vmatpush.bf16.msra.mxu0 %v886
    %1163 = vmatmul.bf16.gmra.mxu0 %v297
    %v1164 = vpop.f32.mrf.mxu0
    %v1165 = vadd.f32 %v1152, %v1164
    %v1166 = vpop.f32.mrf.mxu0
    %1167 = vdwg.mxu0
    %1168 = vmatpush.bf16.msra.mxu0 %v946
    %1169 = vmatpush.bf16.msra.mxu0 %v942
    %1170 = vmatpush.bf16.msra.mxu0 %v938
    %1171 = vmatpush.bf16.msra.mxu0 %v934
    %1172 = vmatpush.bf16.msra.mxu0 %v930
    %1173 = vmatpush.bf16.msra.mxu0 %v926
    %1174 = vmatpush.bf16.msra.mxu0 %v922
    %1175 = vmatpush.bf16.msra.mxu0 %v918
    %1176 = vmatmul.bf16.gmra.mxu0 %v298
    %v1177 = vpop.f32.mrf.mxu0
    %v1178 = vadd.f32 %v1165, %v1177
    %v1179 = vpop.f32.mrf.mxu0
    %1180 = vdwg.mxu0
    %1181 = vmatpush.bf16.msra.mxu0 %v851
    %1182 = vmatpush.bf16.msra.mxu0 %v847
    %1183 = vmatpush.bf16.msra.mxu0 %v843
    %1184 = vmatpush.bf16.msra.mxu0 %v839
    %1185 = vmatpush.bf16.msra.mxu0 %v835
    %1186 = vmatpush.bf16.msra.mxu0 %v831
    %1187 = vmatpush.bf16.msra.mxu0 %v827
    %1188 = vmatpush.bf16.msra.mxu0 %v823
    %1189 = vmatmul.bf16.gmra.mxu0 %v295
    %v1190 = vpop.f32.mrf.mxu0
    %v1191 = vadd.f32 %v431, %v1190
    %v1192 = vpop.f32.mrf.mxu0
    %1193 = vdwg.mxu0
    %1194 = vmatpush.bf16.msra.mxu0 %v883
    %1195 = vmatpush.bf16.msra.mxu0 %v879
    %1196 = vmatpush.bf16.msra.mxu0 %v875
    %1197 = vmatpush.bf16.msra.mxu0 %v871
    %1198 = vmatpush.bf16.msra.mxu0 %v867
    %1199 = vmatpush.bf16.msra.mxu0 %v863
    %1200 = vmatpush.bf16.msra.mxu0 %v859
    %1201 = vmatpush.bf16.msra.mxu0 %v855
    %1202 = vmatmul.bf16.gmra.mxu0 %v296
    %v1203 = vpop.f32.mrf.mxu0
    %v1204 = vadd.f32 %v1191, %v1203
    %v1205 = vpop.f32.mrf.mxu0
    %1206 = vdwg.mxu0
    %1207 = vmatpush.bf16.msra.mxu0 %v915
    %1208 = vmatpush.bf16.msra.mxu0 %v911
    %1209 = vmatpush.bf16.msra.mxu0 %v907
    %1210 = vmatpush.bf16.msra.mxu0 %v903
    %1211 = vmatpush.bf16.msra.mxu0 %v899
    %1212 = vmatpush.bf16.msra.mxu0 %v895
    %1213 = vmatpush.bf16.msra.mxu0 %v891
    %1214 = vmatpush.bf16.msra.mxu0 %v887
    %1215 = vmatmul.bf16.gmra.mxu0 %v297
    %v1216 = vpop.f32.mrf.mxu0
    %v1217 = vadd.f32 %v1204, %v1216
    %v1218 = vpop.f32.mrf.mxu0
    %1219 = vdwg.mxu0
    %1220 = vmatpush.bf16.msra.mxu0 %v947
    %1221 = vmatpush.bf16.msra.mxu0 %v943
    %1222 = vmatpush.bf16.msra.mxu0 %v939
    %1223 = vmatpush.bf16.msra.mxu0 %v935
    %1224 = vmatpush.bf16.msra.mxu0 %v931
    %1225 = vmatpush.bf16.msra.mxu0 %v927
    %1226 = vmatpush.bf16.msra.mxu0 %v923
    %1227 = vmatpush.bf16.msra.mxu0 %v919
    %1228 = vmatmul.bf16.gmra.mxu0 %v298
    %v1229 = vpop.f32.mrf.mxu0
    %v1230 = vadd.f32 %v1217, %v1229
    %v1231 = vpop.f32.mrf.mxu0
    %1232 = vdwg.mxu0
    %1233 = vmatpush.bf16.msra.mxu0 %v852
    %1234 = vmatpush.bf16.msra.mxu0 %v848
    %1235 = vmatpush.bf16.msra.mxu0 %v844
    %1236 = vmatpush.bf16.msra.mxu0 %v840
    %1237 = vmatpush.bf16.msra.mxu0 %v836
    %1238 = vmatpush.bf16.msra.mxu0 %v832
    %1239 = vmatpush.bf16.msra.mxu0 %v828
    %1240 = vmatpush.bf16.msra.mxu0 %v824
    %1241 = vmatmul.bf16.gmra.mxu0 %v295
    %v1242 = vpop.f32.mrf.mxu0
    %v1243 = vadd.f32 %v432, %v1242
    %v1244 = vpop.f32.mrf.mxu0
    %1245 = vdwg.mxu0
    %1246 = vmatpush.bf16.msra.mxu0 %v884
    %1247 = vmatpush.bf16.msra.mxu0 %v880
    %1248 = vmatpush.bf16.msra.mxu0 %v876
    %1249 = vmatpush.bf16.msra.mxu0 %v872
    %1250 = vmatpush.bf16.msra.mxu0 %v868
    %1251 = vmatpush.bf16.msra.mxu0 %v864
    %1252 = vmatpush.bf16.msra.mxu0 %v860
    %1253 = vmatpush.bf16.msra.mxu0 %v856
    %1254 = vmatmul.bf16.gmra.mxu0 %v296
    %v1255 = vpop.f32.mrf.mxu0
    %v1256 = vadd.f32 %v1243, %v1255
    %v1257 = vpop.f32.mrf.mxu0
    %1258 = vdwg.mxu0
    %1259 = vmatpush.bf16.msra.mxu0 %v916
    %1260 = vmatpush.bf16.msra.mxu0 %v912
    %1261 = vmatpush.bf16.msra.mxu0 %v908
    %1262 = vmatpush.bf16.msra.mxu0 %v904
    %1263 = vmatpush.bf16.msra.mxu0 %v900
    %1264 = vmatpush.bf16.msra.mxu0 %v896
    %1265 = vmatpush.bf16.msra.mxu0 %v892
    %1266 = vmatpush.bf16.msra.mxu0 %v888
    %1267 = vmatmul.bf16.gmra.mxu0 %v297
    %v1268 = vpop.f32.mrf.mxu0
    %v1269 = vadd.f32 %v1256, %v1268
    %v1270 = vpop.f32.mrf.mxu0
    %1271 = vdwg.mxu0
    %1272 = vmatpush.bf16.msra.mxu0 %v948
    %1273 = vmatpush.bf16.msra.mxu0 %v944
    %1274 = vmatpush.bf16.msra.mxu0 %v940
    %1275 = vmatpush.bf16.msra.mxu0 %v936
    %1276 = vmatpush.bf16.msra.mxu0 %v932
    %1277 = vmatpush.bf16.msra.mxu0 %v928
    %1278 = vmatpush.bf16.msra.mxu0 %v924
    %1279 = vmatpush.bf16.msra.mxu0 %v920
    %1280 = vmatmul.bf16.gmra.mxu0 %v298
    %v1281 = vpop.f32.mrf.mxu0
    %v1282 = vadd.f32 %v1269, %v1281
    %v1283 = vpop.f32.mrf.mxu0
    %1284 = vdwg.mxu0
    %v1285 = vmax.f32 %v1126, 0.0
    %v1286 = vmax.f32 %v1178, 0.0
    %v1287 = vmax.f32 %v1230, 0.0
    %v1288 = vmax.f32 %v1282, 0.0
    %v1289 = vpack.c.bf16 %v1285, %v1285
    %v1290 = vpack.c.bf16 %v1286, %v1286
    %v1291 = vpack.c.bf16 %v1287, %v1287
    %v1292 = vpack.c.bf16 %v1288, %v1288
    %v1293 = vld [vmem:[%s7] sm:$0xf]
    %s1294 = sld [smem:[#allocation2]]
    %v1295 = vstv %s1294
    %1297 = vst [vmem:[#allocation1] ss:$9 sm:$0xff] %v1293
    %v1298 = vld [vmem:[#allocation1] sm:$0xff]
    %v1299 = vld [vmem:[#allocation1 + $0x9] sm:$0xff]
    %v1300 = vld [vmem:[#allocation1 + $0x12] sm:$0xff]
    %v1301 = vld [vmem:[#allocation1 + $0x1b] sm:$0xff]
    %1306 = vmatpush.bf16.xpose.msra.mxu0 0
    %1307 = vmatpush.bf16.xpose.msra.mxu0 0
    %1308 = vmatpush.bf16.xpose.msra.mxu0 0
    %1309 = vmatpush.bf16.xpose.msra.mxu0 0
    %1310 = vmatpush.bf16.xpose.msra.mxu0 0
    %1311 = vmatpush.bf16.xpose.msra.mxu0 0
    %1312 = vmatpush.bf16.xpose.msra.mxu0 0
    %1313 = vmatpush.bf16.xpose.msra.mxu0 %v1289
    %1314 = vmatmul.bf16.gmra.mxu0 %v1298
    %v1315 = vpop.f32.mrf.mxu0
    %v1316 = vadd.f32 %v1295, %v1315
    %v1317 = vpop.f32.mrf.mxu0
    %1318 = vdwg.mxu0
    %1319 = vmatpush.bf16.xpose.msra.mxu0 0
    %1320 = vmatpush.bf16.xpose.msra.mxu0 0
    %1321 = vmatpush.bf16.xpose.msra.mxu0 0
    %1322 = vmatpush.bf16.xpose.msra.mxu0 0
    %1323 = vmatpush.bf16.xpose.msra.mxu0 0
    %1324 = vmatpush.bf16.xpose.msra.mxu0 0
    %1325 = vmatpush.bf16.xpose.msra.mxu0 0
    %1326 = vmatpush.bf16.xpose.msra.mxu0 %v1290
    %1327 = vmatmul.bf16.gmra.mxu0 %v1299
    %v1328 = vpop.f32.mrf.mxu0
    %v1329 = vadd.f32 %v1316, %v1328
    %v1330 = vpop.f32.mrf.mxu0
    %1331 = vdwg.mxu0
    %1332 = vmatpush.bf16.xpose.msra.mxu0 0
    %1333 = vmatpush.bf16.xpose.msra.mxu0 0
    %1334 = vmatpush.bf16.xpose.msra.mxu0 0
    %1335 = vmatpush.bf16.xpose.msra.mxu0 0
    %1336 = vmatpush.bf16.xpose.msra.mxu0 0
    %1337 = vmatpush.bf16.xpose.msra.mxu0 0
    %1338 = vmatpush.bf16.xpose.msra.mxu0 0
    %1339 = vmatpush.bf16.xpose.msra.mxu0 %v1291
    %1340 = vmatmul.bf16.gmra.mxu0 %v1300
    %v1341 = vpop.f32.mrf.mxu0
    %v1342 = vadd.f32 %v1329, %v1341
    %v1343 = vpop.f32.mrf.mxu0
    %1344 = vdwg.mxu0
    %1345 = vmatpush.bf16.xpose.msra.mxu0 0
    %1346 = vmatpush.bf16.xpose.msra.mxu0 0
    %1347 = vmatpush.bf16.xpose.msra.mxu0 0
    %1348 = vmatpush.bf16.xpose.msra.mxu0 0
    %1349 = vmatpush.bf16.xpose.msra.mxu0 0
    %1350 = vmatpush.bf16.xpose.msra.mxu0 0
    %1351 = vmatpush.bf16.xpose.msra.mxu0 0
    %1352 = vmatpush.bf16.xpose.msra.mxu0 %v1292
    %1353 = vmatmul.bf16.gmra.mxu0 %v1301
    %v1354 = vpop.f32.mrf.mxu0
    %v1355 = vadd.f32 %v1342, %v1354
    %v1356 = vpop.f32.mrf.mxu0
    %1357 = vdwg.mxu0
    %vm1358 = vcmask 8192
    %1359 = vst.msk [vmem:[#allocation14] sm:$0x1] %vm1358, %v1355
    // Predicated region
    $region62: #{tpu_custom_call.1} parent=1 // pred_check
      _
    $region63: #{tpu_custom_call.1} parent=1 // pred_check_branch
      %1361 = sbr.rel (0) target = $region65
    $region64: #{tpu_custom_call.1} parent=1 // pred_region
      %1363 = vsyncadd [#allocation5], 0
      %s1365 = sshll.u32 [#allocation14], 4
      %s1366 = int_to_ptr.vmem [resolvable:$true] %s1365
      %s1367 = sshll.u32 %s9, 4
      %s1368 = int_to_ptr.hbm [resolvable:$true] %s1367
      %1370 = dma.vmem_to_hbm [thread:$0]  %s1366, 16, %s1368, [#allocation5]
    $region65: #{tpu_custom_call.1} parent=1 // pred_fallthru
      _
    // Predicated region
    $region66: #{tpu_custom_call.1} parent=1 // pred_check
      _
    $region67: #{tpu_custom_call.1} parent=1 // pred_check_branch
      %1372 = sbr.rel (0) target = $region69
    $region68: #{tpu_custom_call.1} parent=1 // pred_region
      %1374 = dma.done [#allocation5], 16
    $region69: #{tpu_custom_call.1} parent=1 // pred_fallthru
      _
    %1375 = vsyncpa [#allocation4], 1
    %1376 = vsyncpa [#allocation7], 1
    %1377 = vsyncpa [#allocation10], 1
    %1378 = vsyncpa [#allocation13], 1
    %1379 = vsyncpa [#allocation5], 1

</llo_original>
